<compile_context>
chip_gen: v6e
topology: v6e:2x2x1
jax: 0.10.0
libtpu: 0.0.40
codegen_flags: <defaults>
</compile_context>

<pallas_src>
import functools

import jax
import jax.numpy as jnp
from jax import lax
from jax.experimental import pallas as pl
from jax.experimental.pallas import tpu as pltpu


def _round_up(x, m):
    return (x + m - 1) // m * m


_VMEM_LIMIT = 32 * 1024 * 1024   # safe scoped-VMEM limit on v5e/v6e/v7x


# ---------------------------------------------------------------------------
# Stage 1: input-to-gate projection for all timesteps.
#   x2: (M, E) with M = T*Bp, w: (E, 4*Hp), b: (1, 4*Hp) -> (M, 4*Hp)
# ---------------------------------------------------------------------------
def _gates_kernel(x_ref, w_ref, b_ref, out_ref):
    out_ref[...] = (
        jnp.dot(x_ref[...], w_ref[...], preferred_element_type=jnp.float32)
        + b_ref[...])


def _gates_pallas(x2, w_ih_t, b, m_tile):
    M, E = x2.shape
    G = w_ih_t.shape[1]
    return pl.pallas_call(
        _gates_kernel,
        out_shape=jax.ShapeDtypeStruct((M, G), jnp.float32),
        grid=(M // m_tile,),
        in_specs=[
            pl.BlockSpec((m_tile, E), lambda i: (i, 0)),
            pl.BlockSpec((E, G), lambda i: (0, 0)),       # resident weights
            pl.BlockSpec((1, G), lambda i: (0, 0)),       # resident bias
        ],
        out_specs=pl.BlockSpec((m_tile, G), lambda i: (i, 0)),
        compiler_params=pltpu.CompilerParams(
            dimension_semantics=("parallel",),
            vmem_limit_bytes=_VMEM_LIMIT),
    )(x2, w_ih_t, b)


# ---------------------------------------------------------------------------
# Stage 2: sequential LSTM recurrence.  Grid over T; h/c persist in scratch.
#   xg: (T, Bp, 4*Hp) precomputed gates, w_hh: (Hp, 4*Hp) -> hs: (T, Bp, Hp)
# ---------------------------------------------------------------------------
def _lstm_kernel(xg_ref, w_hh_ref, hs_ref, h_ref, c_ref):
    Hp = h_ref.shape[1]
    t = pl.program_id(0)

    @pl.when(t == 0)
    def _():
        h_ref[...] = jnp.zeros_like(h_ref)
        c_ref[...] = jnp.zeros_like(c_ref)

    # Only the recurrent matmul is on the serial critical path.
    gates = xg_ref[0] + jnp.dot(h_ref[...], w_hh_ref[...],
                                preferred_element_type=jnp.float32)  # (Bp, 4Hp)

    # PyTorch gate order: input, forget, cell(g), output.  Slices are
    # lane-aligned because every gate block was padded to Hp (multiple of 128).
    i_g = jax.nn.sigmoid(gates[:, 0 * Hp:1 * Hp])
    f_g = jax.nn.sigmoid(gates[:, 1 * Hp:2 * Hp])
    g_g = jnp.tanh(gates[:, 2 * Hp:3 * Hp])
    o_g = jax.nn.sigmoid(gates[:, 3 * Hp:4 * Hp])

    c_new = f_g * c_ref[...] + i_g * g_g
    h_new = o_g * jnp.tanh(c_new)
    c_ref[...] = c_new
    h_ref[...] = h_new
    hs_ref[0] = h_new


def _lstm_pallas(xg, w_hh_t, Hp):
    T, Bp, G = xg.shape
    return pl.pallas_call(
        _lstm_kernel,
        out_shape=jax.ShapeDtypeStruct((T, Bp, Hp), jnp.float32),
        grid=(T,),
        in_specs=[
            pl.BlockSpec((1, Bp, G), lambda t: (t, 0, 0)),
            pl.BlockSpec((Hp, G), lambda t: (0, 0)),      # resident weights
        ],
        out_specs=pl.BlockSpec((1, Bp, Hp), lambda t: (t, 0, 0)),
        scratch_shapes=[
            pltpu.VMEM((Bp, Hp), jnp.float32),   # h (persists across grid steps)
            pltpu.VMEM((Bp, Hp), jnp.float32),   # c
        ],
        compiler_params=pltpu.CompilerParams(
            dimension_semantics=("arbitrary",),
            vmem_limit_bytes=_VMEM_LIMIT),
    )(xg, w_hh_t)


# ---------------------------------------------------------------------------
# Stage 3: FC projection, hoisted out of the recurrence.
#   hs_bt: (Bp, T, Hp) f32, w: (Hp, Vp) bf16, b: (1, Vp) -> logits (Bp, T, Vp)
#   Gridded over lane-dense vocab tiles; output written batch-major directly.
# ---------------------------------------------------------------------------
def _fc_kernel(hs_ref, w_ref, b_ref, out_ref):
    Bp, T, Hp = hs_ref.shape
    Vt = out_ref.shape[2]
    h = hs_ref[...].reshape(Bp * T, Hp).astype(jnp.bfloat16)   # bf16 MXU operands
    y = jnp.dot(h, w_ref[...], preferred_element_type=jnp.float32)  # (Bp*T, Vt)
    out_ref[...] = y.reshape(Bp, T, Vt) + b_ref[...]


def _fc_pallas(hs_bt, fc_w_t, fc_b, v_tile):
    Bp, T, Hp = hs_bt.shape
    Vp = fc_w_t.shape[1]
    return pl.pallas_call(
        _fc_kernel,
        out_shape=jax.ShapeDtypeStruct((Bp, T, Vp), jnp.float32),
        grid=(Vp // v_tile,),
        in_specs=[
            pl.BlockSpec((Bp, T, Hp), lambda v: (0, 0, 0)),   # resident hiddens
            pl.BlockSpec((Hp, v_tile), lambda v: (0, v)),
            pl.BlockSpec((1, v_tile), lambda v: (0, v)),
        ],
        out_specs=pl.BlockSpec((Bp, T, v_tile), lambda v: (0, 0, v)),
        compiler_params=pltpu.CompilerParams(
            dimension_semantics=("parallel",),
            vmem_limit_bytes=_VMEM_LIMIT),
    )(hs_bt, fc_w_t, fc_b)


# ---------------------------------------------------------------------------
# Parameter init (PyTorch defaults: Embedding ~ N(0,1); LSTM ~ U(-1/sqrt(H),
# 1/sqrt(H)); fc.weight xavier_normal_; fc.bias default U(-1/sqrt(H), 1/sqrt(H)))
# ---------------------------------------------------------------------------
def init_params(key, embed_size, hidden_size, vocab_size):
    k = jax.random.split(key, 7)
    s = 1.0 / (hidden_size ** 0.5)
    return {
        "embed": jax.random.normal(k[0], (vocab_size, embed_size), jnp.float32),
        "w_ih": jax.random.uniform(k[1], (4 * hidden_size, embed_size),
                                   jnp.float32, -s, s),
        "w_hh": jax.random.uniform(k[2], (4 * hidden_size, hidden_size),
                                   jnp.float32, -s, s),
        "b_ih": jax.random.uniform(k[3], (4 * hidden_size,), jnp.float32, -s, s),
        "b_hh": jax.random.uniform(k[4], (4 * hidden_size,), jnp.float32, -s, s),
        "fc_w": jax.random.normal(k[5], (vocab_size, hidden_size), jnp.float32)
                * (2.0 / (hidden_size + vocab_size)) ** 0.5,
        "fc_b": jax.random.uniform(k[6], (vocab_size,), jnp.float32, -s, s),
    }


@functools.partial(jax.jit, static_argnames=("hidden_size",))
def decoder_rnn_forward(params, features, captions, hidden_size):
    """features: (B, E) float32, captions: (B, L) int32 -> logits (B, L, V)."""
    B, E = features.shape
    H = hidden_size
    V = params["fc_w"].shape[0]

    # XLA glue: embedding gather (data-dependent), concat, padding / layout.
    # The gather stays in XLA on purpose; a Pallas Element-gather adds nothing
    # at these sizes.
    cap = captions[:, :-1]                                        # (B, L-1)
    emb = jnp.take(params["embed"], cap, axis=0)                  # (B, L-1, E)
    inputs = jnp.concatenate([features[:, None, :], emb], axis=1)  # (B, T, E)
    T = inputs.shape[1]

    Bp = _round_up(B, 8)                 # f32 sublane alignment
    Hp = _round_up(H, 128)               # lane-aligned hidden / gate blocks
    Vp = _round_up(V, 128) if V <= 512 else _round_up(V, 512)
    v_tile = min(Vp, 512)                # lane-dense logits tiles

    x_tbe = jnp.transpose(inputs, (1, 0, 2))                      # (T, B, E)
    if Bp != B:
        x_tbe = jnp.pad(x_tbe, ((0, 0), (0, Bp - B), (0, 0)))

    # Gate weights: PyTorch layout (4H, in) with rows [i|f|g|o].  Transpose and
    # pad each gate block to Hp columns -> lane-aligned gate slices in-kernel.
    def gate_pad_cols(w_t):                                       # (in,4H)->(in,4Hp)
        return jnp.concatenate(
            [jnp.pad(w_t[:, g * H:(g + 1) * H], ((0, 0), (0, Hp - H)))
             for g in range(4)], axis=1)

    w_ih_t = gate_pad_cols(params["w_ih"].T)                      # (E, 4Hp)
    w_hh_t = jnp.pad(gate_pad_cols(params["w_hh"].T),
                     ((0, Hp - H), (0, 0)))                       # (Hp, 4Hp)
    b_gates = gate_pad_cols((params["b_ih"] + params["b_hh"])[None, :])  # (1, 4Hp)

    # FC weights in bf16 (halves VMEM/HBM traffic at vocab scale); f32 accum.
    fc_w_t = jnp.pad(params["fc_w"].T,
                     ((0, Hp - H), (0, Vp - V))).astype(jnp.bfloat16)    # (Hp, Vp)
    fc_b = jnp.pad(params["fc_b"], (0, Vp - V))[None, :]          # (1, Vp)

    # Stage 1: all-timestep input projection as one pipelined matmul.
    M = T * Bp
    m_tile = Bp
    for d in range(T, 0, -1):            # largest row tile <= 512 that divides M
        if T % d == 0 and Bp * d <= 512:
            m_tile = Bp * d
            break
    xg2 = _gates_pallas(x_tbe.reshape(M, E), w_ih_t, b_gates, m_tile)  # (M, 4Hp)
    xg = xg2.reshape(T, Bp, 4 * Hp)

    # Stage 2: serial LSTM recurrence (grid over T, h/c in VMEM scratch).
    hs = _lstm_pallas(xg, w_hh_t, Hp)                             # (T, Bp, Hp)

    # Stage 3: FC projection with batch-major, lane-dense logits.  Transposing
    # the small (T,Bp,Hp) hiddens here replaces a full extra HBM pass over the
    # much larger (B,T,V) logits tensor.
    hs_bt = jnp.transpose(hs, (1, 0, 2))                          # (Bp, T, Hp)
    logits = _fc_pallas(hs_bt, fc_w_t, fc_b, v_tile)              # (Bp, T, Vp)

    return logits[:B, :, :V]


def decoder_rnn_reference(params, features, captions):
    """Pure-JAX f32 reference (PyTorch semantics) for correctness check."""
    cap = captions[:, :-1]
    emb = jnp.take(params["embed"], cap, axis=0)
    inputs = jnp.concatenate([features[:, None, :], emb], axis=1)  # (B, T, E)
    B = inputs.shape[0]
    H = params["w_hh"].shape[1]

    def step(carry, x_t):
        h, c = carry
        gates = (x_t @ params["w_ih"].T + h @ params["w_hh"].T
                 + params["b_ih"] + params["b_hh"])
        i_g = jax.nn.sigmoid(gates[:, 0:H])
        f_g = jax.nn.sigmoid(gates[:, H:2 * H])
        g_g = jnp.tanh(gates[:, 2 * H:3 * H])
        o_g = jax.nn.sigmoid(gates[:, 3 * H:4 * H])
        c = f_g * c + i_g * g_g
        h = o_g * jnp.tanh(c)
        return (h, c), h

    init = (jnp.zeros((B, H), jnp.float32), jnp.zeros((B, H), jnp.float32))
    _, hs = lax.scan(step, init, jnp.transpose(inputs, (1, 0, 2)))   # (T, B, H)
    lstm_out = jnp.transpose(hs, (1, 0, 2))                          # (B, T, H)
    return lstm_out @ params["fc_w"].T + params["fc_b"]


if __name__ == "__main__":
    B, E, H, V, L = 2, 32, 32, 64, 8   # batch, embed, hidden, vocab, caption len

    key = jax.random.PRNGKey(0)
    k_par, k_feat, k_cap = jax.random.split(key, 3)

    params = init_params(k_par, E, H, V)
    features = jax.random.normal(k_feat, (B, E), jnp.float32)
    captions = jax.random.randint(k_cap, (B, L), 0, V, dtype=jnp.int32)

    out = decoder_rnn_forward(params, features, captions, H)
    out = jax.block_until_ready(out)

    assert out.shape == (B, L, V), out.shape

    ref = decoder_rnn_reference(params, features, captions)
    err = float(jnp.max(jnp.abs(out - ref)))
    # FC runs bf16 on the MXU (f32 accumulation); everything else is f32.
    assert err < 2e-2, err

    print("KERNEL_OK")
</pallas_src>

<mosaic_0001>
module attributes {stable_mosaic.version = 11 : i64} {
  func.func @_gates_kernel(%arg0: i32, %arg1: memref<64x32xf32, #tpu.memory_space<vmem>>, %arg2: memref<32x512xf32, #tpu.memory_space<vmem>>, %arg3: memref<1x512xf32, #tpu.memory_space<vmem>>, %arg4: memref<64x512xf32, #tpu.memory_space<vmem>>) attributes {dimension_semantics = [#tpu.dimension_semantics<parallel>], iteration_bounds = array<i64: 1>, scalar_prefetch = 0 : i64, scratch_operands = 0 : i64, tpu.core_type = #tpu.core_type<tc>, window_params = [{transform_indices = @transform_0, window_bounds = array<i64: 64, 32>}, {pipeline_mode = #tpu.pipeline_mode<synchronous>, transform_indices = @transform_1, window_bounds = array<i64: 32, 512>}, {pipeline_mode = #tpu.pipeline_mode<synchronous>, transform_indices = @transform_2, window_bounds = array<i64: 1, 512>}, {transform_indices = @transform_3, window_bounds = array<i64: 64, 512>}]} {
    %c0 = arith.constant 0 : index
    %c0_0 = arith.constant 0 : index
    %0 = vector.load %arg1[%c0, %c0_0] : memref<64x32xf32, #tpu.memory_space<vmem>>, vector<64x32xf32>
    %c0_1 = arith.constant 0 : index
    %c0_2 = arith.constant 0 : index
    %1 = vector.load %arg2[%c0_1, %c0_2] : memref<32x512xf32, #tpu.memory_space<vmem>>, vector<32x512xf32>
    %cst = arith.constant dense<0.000000e+00> : vector<64x512xf32>
    %2 = tpu.matmul %0, %1, %cst {dimension_numbers = #tpu.dot_dimension_numbers<[1], [0], [0], [1], [0, 0, 1, 1], [], []>} : vector<64x32xf32>, vector<32x512xf32>, vector<64x512xf32> -> vector<64x512xf32>
    %c0_3 = arith.constant 0 : index
    %c0_4 = arith.constant 0 : index
    %3 = vector.load %arg3[%c0_3, %c0_4] : memref<1x512xf32, #tpu.memory_space<vmem>>, vector<1x512xf32>
    %4 = vector.broadcast %3 : vector<1x512xf32> to vector<64x512xf32>
    %5 = arith.addf %2, %4 : vector<64x512xf32>
    %c0_5 = arith.constant 0 : index
    %c0_6 = arith.constant 0 : index
    %6 = vector.load %arg4[%c0_5, %c0_6] : memref<64x512xf32, #tpu.memory_space<vmem>>, vector<64x512xf32>
    tpu.vector_store %arg4[%c0_5, %c0_6], %5 {strides = array<i32>} : memref<64x512xf32, #tpu.memory_space<vmem>>, vector<64x512xf32>,
    return
  }
  func.func @transform_0(%arg0: i32) -> (i32, i32) {
    %c0_i32 = arith.constant 0 : i32
    %c0_i32_0 = arith.constant 0 : i32
    return %arg0, %c0_i32 : i32, i32
  }
  func.func @transform_1(%arg0: i32) -> (i32, i32) {
    %c0_i32 = arith.constant 0 : i32
    %c0_i32_0 = arith.constant 0 : i32
    %c0_i32_1 = arith.constant 0 : i32
    return %c0_i32, %c0_i32_0 : i32, i32
  }
  func.func @transform_2(%arg0: i32) -> (i32, i32) {
    %c0_i32 = arith.constant 0 : i32
    %c0_i32_0 = arith.constant 0 : i32
    %c0_i32_1 = arith.constant 0 : i32
    return %c0_i32, %c0_i32_0 : i32, i32
  }
  func.func @transform_3(%arg0: i32) -> (i32, i32) {
    %c0_i32 = arith.constant 0 : i32
    %c0_i32_0 = arith.constant 0 : i32
    return %arg0, %c0_i32 : i32, i32
  }
}

module attributes {stable_mosaic.version = 11 : i64} {
  func.func @_fc_kernel(%arg0: i32, %arg1: memref<8x8x128xf32, #tpu.memory_space<vmem>>, %arg2: memref<128x128xbf16, #tpu.memory_space<vmem>>, %arg3: memref<1x128xf32, #tpu.memory_space<vmem>>, %arg4: memref<8x8x128xf32, #tpu.memory_space<vmem>>) attributes {dimension_semantics = [#tpu.dimension_semantics<parallel>], iteration_bounds = array<i64: 1>, scalar_prefetch = 0 : i64, scratch_operands = 0 : i64, tpu.core_type = #tpu.core_type<tc>, window_params = [{pipeline_mode = #tpu.pipeline_mode<synchronous>, transform_indices = @transform_0, window_bounds = array<i64: 8, 8, 128>}, {transform_indices = @transform_1, window_bounds = array<i64: 128, 128>}, {transform_indices = @transform_2, window_bounds = array<i64: 1, 128>}, {transform_indices = @transform_3, window_bounds = array<i64: 8, 8, 128>}]} {
    %c0 = arith.constant 0 : index
    %c0_0 = arith.constant 0 : index
    %c0_1 = arith.constant 0 : index
    %0 = vector.load %arg1[%c0, %c0_0, %c0_1] : memref<8x8x128xf32, #tpu.memory_space<vmem>>, vector<8x8x128xf32>
    %1 = vector.shape_cast %0 : vector<8x8x128xf32> to vector<64x128xf32>
    %2 = arith.truncf %1 : vector<64x128xf32> to vector<64x128xbf16>
    %c0_2 = arith.constant 0 : index
    %c0_3 = arith.constant 0 : index
    %3 = vector.load %arg2[%c0_2, %c0_3] : memref<128x128xbf16, #tpu.memory_space<vmem>>, vector<128x128xbf16>
    %cst = arith.constant dense<0.000000e+00> : vector<64x128xf32>
    %4 = tpu.matmul %2, %3, %cst {dimension_numbers = #tpu.dot_dimension_numbers<[1], [0], [0], [1], [0, 0, 1, 1], [], []>} : vector<64x128xbf16>, vector<128x128xbf16>, vector<64x128xf32> -> vector<64x128xf32>
    %5 = vector.shape_cast %4 : vector<64x128xf32> to vector<8x8x128xf32>
    %c0_4 = arith.constant 0 : index
    %c0_5 = arith.constant 0 : index
    %6 = vector.load %arg3[%c0_4, %c0_5] : memref<1x128xf32, #tpu.memory_space<vmem>>, vector<1x128xf32>
    %7 = vector.shape_cast %6 : vector<1x128xf32> to vector<1x1x128xf32>
    %8 = vector.broadcast %7 : vector<1x1x128xf32> to vector<8x8x128xf32>
    %9 = arith.addf %5, %8 : vector<8x8x128xf32>
    %c0_6 = arith.constant 0 : index
    %c0_7 = arith.constant 0 : index
    %c0_8 = arith.constant 0 : index
    %10 = vector.load %arg4[%c0_6, %c0_7, %c0_8] : memref<8x8x128xf32, #tpu.memory_space<vmem>>, vector<8x8x128xf32>
    tpu.vector_store %arg4[%c0_6, %c0_7, %c0_8], %9 {strides = array<i32>} : memref<8x8x128xf32, #tpu.memory_space<vmem>>, vector<8x8x128xf32>,
    return
  }
  func.func @transform_0(%arg0: i32) -> (i32, i32, i32) {
    %c0_i32 = arith.constant 0 : i32
    %c0_i32_0 = arith.constant 0 : i32
    %c0_i32_1 = arith.constant 0 : i32
    %c0_i32_2 = arith.constant 0 : i32
    return %c0_i32, %c0_i32_0, %c0_i32_1 : i32, i32, i32
  }
  func.func @transform_1(%arg0: i32) -> (i32, i32) {
    %c0_i32 = arith.constant 0 : i32
    %c0_i32_0 = arith.constant 0 : i32
    return %c0_i32, %arg0 : i32, i32
  }
  func.func @transform_2(%arg0: i32) -> (i32, i32) {
    %c0_i32 = arith.constant 0 : i32
    %c0_i32_0 = arith.constant 0 : i32
    return %c0_i32, %arg0 : i32, i32
  }
  func.func @transform_3(%arg0: i32) -> (i32, i32, i32) {
    %c0_i32 = arith.constant 0 : i32
    %c0_i32_0 = arith.constant 0 : i32
    %c0_i32_1 = arith.constant 0 : i32
    return %c0_i32, %c0_i32_0, %arg0 : i32, i32, i32
  }
}

module attributes {stable_mosaic.version = 11 : i64} {
  func.func @_lstm_kernel(%arg0: i32, %arg1: memref<1x8x512xf32, #tpu.memory_space<vmem>>, %arg2: memref<128x512xf32, #tpu.memory_space<vmem>>, %arg3: memref<1x8x128xf32, #tpu.memory_space<vmem>>, %arg4: memref<8x128xf32, #tpu.memory_space<vmem>>, %arg5: memref<8x128xf32, #tpu.memory_space<vmem>>) attributes {dimension_semantics = [#tpu.dimension_semantics<arbitrary>], iteration_bounds = array<i64: 8>, scalar_prefetch = 0 : i64, scratch_operands = 2 : i64, tpu.core_type = #tpu.core_type<tc>, window_params = [{transform_indices = @transform_0, window_bounds = array<i64: 1, 8, 512>}, {pipeline_mode = #tpu.pipeline_mode<synchronous>, transform_indices = @transform_1, window_bounds = array<i64: 128, 512>}, {transform_indices = @transform_2, window_bounds = array<i64: 1, 8, 128>}]} {
    %c0_i32 = arith.constant 0 : i32
    %0 = arith.cmpi eq, %arg0, %c0_i32 : i32
    %1 = arith.extui %0 : i1 to i32
    %c0_i32_0 = arith.constant 0 : i32
    %2 = arith.cmpi ne, %1, %c0_i32_0 : i32
    scf.if %2 {
      %cst_19 = arith.constant 0.000000e+00 : f32
      %40 = vector.broadcast %cst_19 : f32 to vector<8x128xf32>
      %c0_20 = arith.constant 0 : index
      %c0_21 = arith.constant 0 : index
      %41 = vector.load %arg4[%c0_20, %c0_21] : memref<8x128xf32, #tpu.memory_space<vmem>>, vector<8x128xf32>
      tpu.vector_store %arg4[%c0_20, %c0_21], %40 {strides = array<i32>} : memref<8x128xf32, #tpu.memory_space<vmem>>, vector<8x128xf32>,
      %cst_22 = arith.constant 0.000000e+00 : f32
      %42 = vector.broadcast %cst_22 : f32 to vector<8x128xf32>
      %c0_23 = arith.constant 0 : index
      %c0_24 = arith.constant 0 : index
      %43 = vector.load %arg5[%c0_23, %c0_24] : memref<8x128xf32, #tpu.memory_space<vmem>>, vector<8x128xf32>
      tpu.vector_store %arg5[%c0_23, %c0_24], %42 {strides = array<i32>} : memref<8x128xf32, #tpu.memory_space<vmem>>, vector<8x128xf32>,
    } else {
    }
    %c0 = arith.constant 0 : index
    %c0_1 = arith.constant 0 : index
    %c0_2 = arith.constant 0 : index
    %3 = vector.load %arg1[%c0, %c0_1, %c0_2] : memref<1x8x512xf32, #tpu.memory_space<vmem>>, vector<1x8x512xf32>
    %4 = vector.shape_cast %3 : vector<1x8x512xf32> to vector<8x512xf32>
    %c0_3 = arith.constant 0 : index
    %c0_4 = arith.constant 0 : index
    %5 = vector.load %arg4[%c0_3, %c0_4] : memref<8x128xf32, #tpu.memory_space<vmem>>, vector<8x128xf32>
    %c0_5 = arith.constant 0 : index
    %c0_6 = arith.constant 0 : index
    %6 = vector.load %arg2[%c0_5, %c0_6] : memref<128x512xf32, #tpu.memory_space<vmem>>, vector<128x512xf32>
    %cst = arith.constant dense<0.000000e+00> : vector<8x512xf32>
    %7 = tpu.matmul %5, %6, %cst {dimension_numbers = #tpu.dot_dimension_numbers<[1], [0], [0], [1], [0, 0, 1, 1], [], []>} : vector<8x128xf32>, vector<128x512xf32>, vector<8x512xf32> -> vector<8x512xf32>
    %8 = arith.addf %4, %7 : vector<8x512xf32>
    %9 = vector.extract_strided_slice %8 {offsets = [0, 0], sizes = [8, 128], strides = [1, 1]} : vector<8x512xf32> to vector<8x128xf32>
    %10 = arith.negf %9 : vector<8x128xf32>
    %11 = math.exp %10 : vector<8x128xf32>
    %cst_7 = arith.constant 1.000000e+00 : f32
    %12 = vector.broadcast %cst_7 : f32 to vector<8x128xf32>
    %13 = arith.addf %12, %11 : vector<8x128xf32>
    %14 = arith.divf %12, %13 : vector<8x128xf32>
    %15 = vector.extract_strided_slice %8 {offsets = [0, 128], sizes = [8, 128], strides = [1, 1]} : vector<8x512xf32> to vector<8x128xf32>
    %16 = arith.negf %15 : vector<8x128xf32>
    %17 = math.exp %16 : vector<8x128xf32>
    %cst_8 = arith.constant 1.000000e+00 : f32
    %18 = vector.broadcast %cst_8 : f32 to vector<8x128xf32>
    %19 = arith.addf %18, %17 : vector<8x128xf32>
    %20 = arith.divf %18, %19 : vector<8x128xf32>
    %21 = vector.extract_strided_slice %8 {offsets = [0, 256], sizes = [8, 128], strides = [1, 1]} : vector<8x512xf32> to vector<8x128xf32>
    %22 = math.tanh %21 : vector<8x128xf32>
    %23 = vector.extract_strided_slice %8 {offsets = [0, 384], sizes = [8, 128], strides = [1, 1]} : vector<8x512xf32> to vector<8x128xf32>
    %24 = arith.negf %23 : vector<8x128xf32>
    %25 = math.exp %24 : vector<8x128xf32>
    %cst_9 = arith.constant 1.000000e+00 : f32
    %26 = vector.broadcast %cst_9 : f32 to vector<8x128xf32>
    %27 = arith.addf %26, %25 : vector<8x128xf32>
    %28 = arith.divf %26, %27 : vector<8x128xf32>
    %c0_10 = arith.constant 0 : index
    %c0_11 = arith.constant 0 : index
    %29 = vector.load %arg5[%c0_10, %c0_11] : memref<8x128xf32, #tpu.memory_space<vmem>>, vector<8x128xf32>
    %30 = arith.mulf %20, %29 : vector<8x128xf32>
    %31 = arith.mulf %14, %22 : vector<8x128xf32>
    %32 = arith.addf %30, %31 : vector<8x128xf32>
    %33 = math.tanh %32 : vector<8x128xf32>
    %34 = arith.mulf %28, %33 : vector<8x128xf32>
    %c0_12 = arith.constant 0 : index
    %c0_13 = arith.constant 0 : index
    %35 = vector.load %arg5[%c0_12, %c0_13] : memref<8x128xf32, #tpu.memory_space<vmem>>, vector<8x128xf32>
    tpu.vector_store %arg5[%c0_12, %c0_13], %32 {strides = array<i32>} : memref<8x128xf32, #tpu.memory_space<vmem>>, vector<8x128xf32>,
    %c0_14 = arith.constant 0 : index
    %c0_15 = arith.constant 0 : index
    %36 = vector.load %arg4[%c0_14, %c0_15] : memref<8x128xf32, #tpu.memory_space<vmem>>, vector<8x128xf32>
    tpu.vector_store %arg4[%c0_14, %c0_15], %34 {strides = array<i32>} : memref<8x128xf32, #tpu.memory_space<vmem>>, vector<8x128xf32>,
    %c0_16 = arith.constant 0 : index
    %c0_17 = arith.constant 0 : index
    %c0_18 = arith.constant 0 : index
    %37 = vector.load %arg3[%c0_16, %c0_17, %c0_18] : memref<1x8x128xf32, #tpu.memory_space<vmem>>, vector<1x8x128xf32>
    %38 = vector.shape_cast %37 : vector<1x8x128xf32> to vector<8x128xf32>
    %39 = vector.shape_cast %34 : vector<8x128xf32> to vector<1x8x128xf32>
    tpu.vector_store %arg3[%c0_16, %c0_17, %c0_18], %39 {strides = array<i32>} : memref<1x8x128xf32, #tpu.memory_space<vmem>>, vector<1x8x128xf32>,
    return
  }
  func.func @transform_0(%arg0: i32) -> (i32, i32, i32) {
    %c0_i32 = arith.constant 0 : i32
    %c0_i32_0 = arith.constant 0 : i32
    %c0_i32_1 = arith.constant 0 : i32
    return %arg0, %c0_i32, %c0_i32_0 : i32, i32, i32
  }
  func.func @transform_1(%arg0: i32) -> (i32, i32) {
    %c0_i32 = arith.constant 0 : i32
    %c0_i32_0 = arith.constant 0 : i32
    %c0_i32_1 = arith.constant 0 : i32
    return %c0_i32, %c0_i32_0 : i32, i32
  }
  func.func @transform_2(%arg0: i32) -> (i32, i32, i32) {
    %c0_i32 = arith.constant 0 : i32
    %c0_i32_0 = arith.constant 0 : i32
    %c0_i32_1 = arith.constant 0 : i32
    return %arg0, %c0_i32, %c0_i32_0 : i32, i32, i32
  }
}

</mosaic_0001>

<llo_original>
// kernel: decoder_rnn_forward.5
$region0: #{decoder_rnn_forward.5}
  #allocation0 [shape = 'u32[]', space=smem, size = 0x4, offset = 0x4, fixed_abs, tag = 'smem constant byte address 0x4 - core index']
  #allocation1 [shape = 'u32[144,128]{1,0:T(1,128)}', space=vmem, size = 0x12000, scoped, tag = 'internal scratch']
  %s0 = inlined_call_operand.vmem [shape: f32[8,8,128], index: 0, kind: input, shape index: {}]
  %s1 = inlined_call_operand.vmem [shape: bf16[128,128], index: 1, kind: input, shape index: {}]
  %s2 = inlined_call_operand.vmem [shape: f32[1,128], index: 2, kind: input, shape index: {}]
  %s3 = inlined_call_operand.vmem [shape: f32[8,8,128], index: 3, kind: output, shape index: {}]
  %s4 = sld [smem:[#allocation0]]
  $region22: #{decoder_rnn_forward.5} parent=0
    _
  %s6 = ssub.s32 1, %s4
  %s7 = scalar_select 0, %s6, %s4
  // Predicated region
  $region2: #{decoder_rnn_forward.5} parent=0 // pred_check
    _
  $region3: #{decoder_rnn_forward.5} parent=0 // pred_check_branch
    %9 = sbr.rel (0) target = $region5
  $region4: #{decoder_rnn_forward.5} parent=0 // pred_region
    _
  $region5: #{decoder_rnn_forward.5} parent=0 // pred_fallthru
    _
  // Predicated region
  $region6: #{decoder_rnn_forward.5} parent=0 // pred_check
    _
  $region7: #{decoder_rnn_forward.5} parent=0 // pred_check_branch
    %11 = sbr.rel (0) target = $region9
  $region8: #{decoder_rnn_forward.5} parent=0 // pred_region
    _
  $region9: #{decoder_rnn_forward.5} parent=0 // pred_fallthru
    _
  // Predicated region
  $region10: #{decoder_rnn_forward.5} parent=0 // pred_check
    _
  $region11: #{decoder_rnn_forward.5} parent=0 // pred_check_branch
    %13 = sbr.rel (0) target = $region13
  $region12: #{decoder_rnn_forward.5} parent=0 // pred_region
    _
  $region13: #{decoder_rnn_forward.5} parent=0 // pred_fallthru
    _
  %v15 = vld [vmem:[%s0] sm:$0xff]
  %v16 = vld [vmem:[%s0 + $0x8] sm:$0xff]
  %v17 = vld [vmem:[%s0 + $0x10] sm:$0xff]
  %v18 = vld [vmem:[%s0 + $0x18] sm:$0xff]
  %v19 = vld [vmem:[%s0 + $0x20] sm:$0xff]
  %v20 = vld [vmem:[%s0 + $0x28] sm:$0xff]
  %v21 = vld [vmem:[%s0 + $0x30] sm:$0xff]
  %v22 = vld [vmem:[%s0 + $0x38] sm:$0xff]
  %v23 = vpack.c.bf16 %v16, %v15
  %v24 = vpack.c.bf16 %v18, %v17
  %v25 = vpack.c.bf16 %v20, %v19
  %v26 = vpack.c.bf16 %v22, %v21
  %v27 = vld [vmem:[%s1] sm:$0xf]
  %v28 = vld [vmem:[%s1 + $0x4] sm:$0xf]
  %v29 = vld [vmem:[%s1 + $0x8] sm:$0xf]
  %v30 = vld [vmem:[%s1 + $0xc] sm:$0xf]
  %v31 = vld [vmem:[%s1 + $0x10] sm:$0xf]
  %v32 = vld [vmem:[%s1 + $0x14] sm:$0xf]
  %v33 = vld [vmem:[%s1 + $0x18] sm:$0xf]
  %v34 = vld [vmem:[%s1 + $0x1c] sm:$0xf]
  %v35 = vld [vmem:[%s1 + $0x20] sm:$0xf]
  %v36 = vld [vmem:[%s1 + $0x24] sm:$0xf]
  %v37 = vld [vmem:[%s1 + $0x28] sm:$0xf]
  %v38 = vld [vmem:[%s1 + $0x2c] sm:$0xf]
  %v39 = vld [vmem:[%s1 + $0x30] sm:$0xf]
  %v40 = vld [vmem:[%s1 + $0x34] sm:$0xf]
  %v41 = vld [vmem:[%s1 + $0x38] sm:$0xf]
  %v42 = vld [vmem:[%s1 + $0x3c] sm:$0xf]
  %v59 = vunpack.c.l.b16 %v27
  %v60 = vunpack.c.l.b16 %v28
  %v61 = vunpack.c.l.b16 %v29
  %v62 = vunpack.c.l.b16 %v30
  %v63 = vunpack.c.l.b16 %v31
  %v64 = vunpack.c.l.b16 %v32
  %v65 = vunpack.c.l.b16 %v33
  %v66 = vunpack.c.l.b16 %v34
  %v67 = vunpack.c.l.b16 %v35
  %v68 = vunpack.c.l.b16 %v36
  %v69 = vunpack.c.l.b16 %v37
  %v70 = vunpack.c.l.b16 %v38
  %v71 = vunpack.c.l.b16 %v39
  %v72 = vunpack.c.l.b16 %v40
  %v73 = vunpack.c.l.b16 %v41
  %v74 = vunpack.c.l.b16 %v42
  %v75 = vpack.c.b16 %v60, %v59
  %v76 = vpack.c.b16 %v62, %v61
  %v77 = vpack.c.b16 %v64, %v63
  %v78 = vpack.c.b16 %v66, %v65
  %v79 = vpack.c.b16 %v68, %v67
  %v80 = vpack.c.b16 %v70, %v69
  %v81 = vpack.c.b16 %v72, %v71
  %v82 = vpack.c.b16 %v74, %v73
  %91 = vmatprep.subr.bf16.mxu0 0
  %92 = vmatpush1.bf16.msra.mxu0 %v82
  %93 = vmatprep.subr.bf16.mxu0 0
  %94 = vmatpush1.bf16.msra.mxu0 %v81
  %95 = vmatprep.subr.bf16.mxu0 0
  %96 = vmatpush1.bf16.msra.mxu0 %v80
  %97 = vmatprep.subr.bf16.mxu0 0
  %98 = vmatpush1.bf16.msra.mxu0 %v79
  %99 = vmatprep.subr.bf16.mxu0 0
  %100 = vmatpush1.bf16.msra.mxu0 %v78
  %101 = vmatprep.subr.bf16.mxu0 0
  %102 = vmatpush1.bf16.msra.mxu0 %v77
  %103 = vmatprep.subr.bf16.mxu0 0
  %104 = vmatpush1.bf16.msra.mxu0 %v76
  %105 = vmatprep.subr.bf16.mxu0 0
  %106 = vmatpush1.bf16.msra.mxu0 %v75
  %107 = vmatprep.subr.bf16.mxu0 0
  %108 = vmatpush2.bf16.msra.mxu0 0
  %109 = vmatprep.subr.bf16.mxu0 0
  %110 = vmatpush2.bf16.msra.mxu0 0
  %111 = vmatprep.subr.bf16.mxu0 0
  %112 = vmatpush2.bf16.msra.mxu0 0
  %113 = vmatprep.subr.bf16.mxu0 0
  %114 = vmatpush2.bf16.msra.mxu0 0
  %115 = vmatprep.subr.bf16.mxu0 0
  %116 = vmatpush2.bf16.msra.mxu0 0
  %117 = vmatprep.subr.bf16.mxu0 0
  %118 = vmatpush2.bf16.msra.mxu0 0
  %119 = vmatprep.subr.bf16.mxu0 0
  %120 = vmatpush2.bf16.msra.mxu0 0
  %121 = vmatprep.subr.bf16.mxu0 0
  %122 = vmatpush2.bf16.msra.mxu0 0
  %123 = vmatprep.mubr.bf16.mxu0 0
  %124 = vmatmul.mubr.bf16.gmra.mxu0 %v23
  %v125 = vpop.f32.mrf.mxu0
  %v126 = vadd.f32 0.0, %v125
  %v127 = vpop.f32.mrf.mxu0
  %v128 = vpop.f32.mrf.mxu0
  %v129 = vadd.f32 0.0, %v128
  %v130 = vpop.f32.mrf.mxu0
  %131 = vmatprep.mubr.bf16.mxu0 0
  %132 = vmatmul.mubr.bf16.gmra.mxu0 %v24
  %v133 = vpop.f32.mrf.mxu0
  %v134 = vadd.f32 0.0, %v133
  %v135 = vpop.f32.mrf.mxu0
  %v136 = vpop.f32.mrf.mxu0
  %v137 = vadd.f32 0.0, %v136
  %v138 = vpop.f32.mrf.mxu0
  %139 = vmatprep.mubr.bf16.mxu0 0
  %140 = vmatmul.mubr.bf16.gmra.mxu0 %v25
  %v141 = vpop.f32.mrf.mxu0
  %v142 = vadd.f32 0.0, %v141
  %v143 = vpop.f32.mrf.mxu0
  %v144 = vpop.f32.mrf.mxu0
  %v145 = vadd.f32 0.0, %v144
  %v146 = vpop.f32.mrf.mxu0
  %147 = vmatprep.mubr.bf16.mxu0 0
  %148 = vmatmul.mubr.bf16.gmra.mxu0 %v26
  %v149 = vpop.f32.mrf.mxu0
  %v150 = vadd.f32 0.0, %v149
  %v151 = vpop.f32.mrf.mxu0
  %v152 = vpop.f32.mrf.mxu0
  %v153 = vadd.f32 0.0, %v152
  %v154 = vpop.f32.mrf.mxu0
  %155 = vdwg.mxu0
  %v156 = vld [vmem:[%s2] sm:$0x1]
  %v158 = vlaneseq
  %v159 = vshrl.u32 %v158, 7
  %v160 = vsub.s32 0, %v159
  %v161 = vrot.slane %v156, %v160
  %v163 = vadd.f32 %v126, %v161
  %v164 = vadd.f32 %v129, %v161
  %v165 = vadd.f32 %v134, %v161
  %v166 = vadd.f32 %v137, %v161
  %v167 = vadd.f32 %v142, %v161
  %v168 = vadd.f32 %v145, %v161
  %v169 = vadd.f32 %v150, %v161
  %v170 = vadd.f32 %v153, %v161
  %171 = vst [vmem:[%s3] sm:$0xff] %v163
  %172 = vst [vmem:[%s3 + $0x8] sm:$0xff] %v164
  %173 = vst [vmem:[%s3 + $0x10] sm:$0xff] %v165
  %174 = vst [vmem:[%s3 + $0x18] sm:$0xff] %v166
  %175 = vst [vmem:[%s3 + $0x20] sm:$0xff] %v167
  %176 = vst [vmem:[%s3 + $0x28] sm:$0xff] %v168
  %177 = vst [vmem:[%s3 + $0x30] sm:$0xff] %v169
  %178 = vst [vmem:[%s3 + $0x38] sm:$0xff] %v170
  // Predicated region
  $region14: #{decoder_rnn_forward.5} parent=0 // pred_check
    _
  $region15: #{decoder_rnn_forward.5} parent=0 // pred_check_branch
    %180 = sbr.rel (0) target = $region17
  $region16: #{decoder_rnn_forward.5} parent=0 // pred_region
    _
  $region17: #{decoder_rnn_forward.5} parent=0 // pred_fallthru
    _
  // Predicated region
  $region18: #{decoder_rnn_forward.5} parent=0 // pred_check
    _
  $region19: #{decoder_rnn_forward.5} parent=0 // pred_check_branch
    %182 = sbr.rel (0) target = $region21
  $region20: #{decoder_rnn_forward.5} parent=0 // pred_region
    _
  $region21: #{decoder_rnn_forward.5} parent=0 // pred_fallthru
    _

// kernel: decoder_rnn_forward.3
$region0: #{decoder_rnn_forward.3}
  #allocation0 [shape = 'u32[]', space=smem, size = 0x4, offset = 0x4, fixed_abs, tag = 'smem constant byte address 0x4 - core index']
  #allocation1 [shape = 'u32[144,128]{1,0:T(1,128)}', space=vmem, size = 0x12000, scoped, tag = 'internal scratch']
  %s0 = inlined_call_operand.vmem [shape: f32[64,32], index: 0, kind: input, shape index: {}]
  %s1 = inlined_call_operand.vmem [shape: f32[32,512], index: 1, kind: input, shape index: {}]
  %s2 = inlined_call_operand.vmem [shape: f32[1,512], index: 2, kind: input, shape index: {}]
  %s3 = inlined_call_operand.vmem [shape: f32[64,512], index: 3, kind: output, shape index: {}]
  %s4 = sld [smem:[#allocation0]]
  $region22: #{decoder_rnn_forward.3} parent=0
    _
  %s6 = ssub.s32 1, %s4
  %s7 = scalar_select 0, %s6, %s4
  // Predicated region
  $region2: #{decoder_rnn_forward.3} parent=0 // pred_check
    _
  $region3: #{decoder_rnn_forward.3} parent=0 // pred_check_branch
    %9 = sbr.rel (0) target = $region5
  $region4: #{decoder_rnn_forward.3} parent=0 // pred_region
    _
  $region5: #{decoder_rnn_forward.3} parent=0 // pred_fallthru
    _
  // Predicated region
  $region6: #{decoder_rnn_forward.3} parent=0 // pred_check
    _
  $region7: #{decoder_rnn_forward.3} parent=0 // pred_check_branch
    %11 = sbr.rel (0) target = $region9
  $region8: #{decoder_rnn_forward.3} parent=0 // pred_region
    _
  $region9: #{decoder_rnn_forward.3} parent=0 // pred_fallthru
    _
  // Predicated region
  $region10: #{decoder_rnn_forward.3} parent=0 // pred_check
    _
  $region11: #{decoder_rnn_forward.3} parent=0 // pred_check_branch
    %13 = sbr.rel (0) target = $region13
  $region12: #{decoder_rnn_forward.3} parent=0 // pred_region
    _
  $region13: #{decoder_rnn_forward.3} parent=0 // pred_fallthru
    _
  %v14 = vld [vmem:[%s0] sm:$0xff]
  %v15 = vld [vmem:[%s0 + $0x8] sm:$0xff]
  %v16 = vld [vmem:[%s0 + $0x10] sm:$0xff]
  %v17 = vld [vmem:[%s0 + $0x18] sm:$0xff]
  %v18 = vld [vmem:[%s0 + $0x20] sm:$0xff]
  %v19 = vld [vmem:[%s0 + $0x28] sm:$0xff]
  %v20 = vld [vmem:[%s0 + $0x30] sm:$0xff]
  %v21 = vld [vmem:[%s0 + $0x38] sm:$0xff]
  %v22 = vld [vmem:[%s1] sm:$0xff]
  %v23 = vld [vmem:[%s1 + $0x8] sm:$0xff]
  %v24 = vld [vmem:[%s1 + $0x10] sm:$0xff]
  %v25 = vld [vmem:[%s1 + $0x18] sm:$0xff]
  %v26 = vld [vmem:[%s1 + $0x20] sm:$0xff]
  %v27 = vld [vmem:[%s1 + $0x28] sm:$0xff]
  %v28 = vld [vmem:[%s1 + $0x30] sm:$0xff]
  %v29 = vld [vmem:[%s1 + $0x38] sm:$0xff]
  %v30 = vld [vmem:[%s1 + $0x40] sm:$0xff]
  %v31 = vld [vmem:[%s1 + $0x48] sm:$0xff]
  %v32 = vld [vmem:[%s1 + $0x50] sm:$0xff]
  %v33 = vld [vmem:[%s1 + $0x58] sm:$0xff]
  %v34 = vld [vmem:[%s1 + $0x60] sm:$0xff]
  %v35 = vld [vmem:[%s1 + $0x68] sm:$0xff]
  %v36 = vld [vmem:[%s1 + $0x70] sm:$0xff]
  %v37 = vld [vmem:[%s1 + $0x78] sm:$0xff]
  %v38 = vld [vmem:[%s2] sm:$0xf]
  %v40 = vlaneseq
  %v41 = vshrl.u32 %v40, 7
  %v42 = vsub.s32 0, %v41
  %v43 = vrot.slane %v38, %v42
  %v44 = vlaneseq
  %v45 = vshrl.u32 %v44, 7
  %v46 = vsub.s32 1, %v45
  %v47 = vrot.slane %v38, %v46
  %v48 = vlaneseq
  %v49 = vshrl.u32 %v48, 7
  %v50 = vsub.s32 2, %v49
  %v51 = vrot.slane %v38, %v50
  %v52 = vlaneseq
  %v53 = vshrl.u32 %v52, 7
  %v54 = vsub.s32 3, %v53
  %v55 = vrot.slane %v38, %v54
  %vm60 = vcmask 261120
  %v62 = vsel %vm60, %v14, 0
  %v65 = vsel %vm60, %v15, 0
  %v68 = vsel %vm60, %v16, 0
  %v71 = vsel %vm60, %v17, 0
  %v74 = vsel %vm60, %v18, 0
  %v77 = vsel %vm60, %v19, 0
  %v80 = vsel %vm60, %v20, 0
  %v83 = vsel %vm60, %v21, 0
  %85 = vmatprep.subr.mxu0 0.0
  %86 = vmatpush1.msra.mxu0 0.0
  %87 = vmatprep.subr.mxu0 0.0
  %88 = vmatpush1.msra.mxu0 0.0
  %89 = vmatprep.subr.mxu0 0.0
  %90 = vmatpush1.msra.mxu0 0.0
  %91 = vmatprep.subr.mxu0 0.0
  %92 = vmatpush1.msra.mxu0 0.0
  %93 = vmatprep.subr.mxu0 0.0
  %94 = vmatpush1.msra.mxu0 0.0
  %95 = vmatprep.subr.mxu0 0.0
  %96 = vmatpush1.msra.mxu0 0.0
  %97 = vmatprep.subr.mxu0 0.0
  %98 = vmatpush1.msra.mxu0 0.0
  %99 = vmatprep.subr.mxu0 0.0
  %100 = vmatpush1.msra.mxu0 0.0
  %101 = vmatprep.subr.mxu0 0.0
  %102 = vmatpush1.msra.mxu0 0.0
  %103 = vmatprep.subr.mxu0 0.0
  %104 = vmatpush1.msra.mxu0 0.0
  %105 = vmatprep.subr.mxu0 0.0
  %106 = vmatpush1.msra.mxu0 0.0
  %107 = vmatprep.subr.mxu0 0.0
  %108 = vmatpush1.msra.mxu0 0.0
  %109 = vmatprep.subr.mxu0 %v35
  %110 = vmatpush1.msra.mxu0 %v34
  %111 = vmatprep.subr.mxu0 %v31
  %112 = vmatpush1.msra.mxu0 %v30
  %113 = vmatprep.subr.mxu0 %v27
  %114 = vmatpush1.msra.mxu0 %v26
  %115 = vmatprep.subr.mxu0 %v23
  %116 = vmatpush1.msra.mxu0 %v22
  %117 = vmatprep.subr.mxu0 0.0
  %118 = vmatpush2.msra.mxu0 0.0
  %119 = vmatprep.subr.mxu0 0.0
  %120 = vmatpush2.msra.mxu0 0.0
  %121 = vmatprep.subr.mxu0 0.0
  %122 = vmatpush2.msra.mxu0 0.0
  %123 = vmatprep.subr.mxu0 0.0
  %124 = vmatpush2.msra.mxu0 0.0
  %125 = vmatprep.subr.mxu0 0.0
  %126 = vmatpush2.msra.mxu0 0.0
  %127 = vmatprep.subr.mxu0 0.0
  %128 = vmatpush2.msra.mxu0 0.0
  %129 = vmatprep.subr.mxu0 0.0
  %130 = vmatpush2.msra.mxu0 0.0
  %131 = vmatprep.subr.mxu0 0.0
  %132 = vmatpush2.msra.mxu0 0.0
  %133 = vmatprep.subr.mxu0 0.0
  %134 = vmatpush2.msra.mxu0 0.0
  %135 = vmatprep.subr.mxu0 0.0
  %136 = vmatpush2.msra.mxu0 0.0
  %137 = vmatprep.subr.mxu0 0.0
  %138 = vmatpush2.msra.mxu0 0.0
  %139 = vmatprep.subr.mxu0 0.0
  %140 = vmatpush2.msra.mxu0 0.0
  %141 = vmatprep.subr.mxu0 0.0
  %142 = vmatpush2.msra.mxu0 0.0
  %143 = vmatprep.subr.mxu0 0.0
  %144 = vmatpush2.msra.mxu0 0.0
  %145 = vmatprep.subr.mxu0 0.0
  %146 = vmatpush2.msra.mxu0 0.0
  %147 = vmatprep.subr.mxu0 0.0
  %148 = vmatpush2.msra.mxu0 0.0
  %149 = vmatprep.mubr.f32.mxu0 0.0
  %150 = vmatmul.mubr.f32.gmra.mxu0 %v62
  %v151 = vpop.f32.mrf.mxu0
  %v152 = vadd.f32 %v43, %v151
  %v153 = vpop.f32.mrf.mxu0
  %v154 = vadd.f32 %v47, %v153
  %155 = vmatprep.mubr.f32.mxu0 0.0
  %156 = vmatmul.mubr.f32.gmra.mxu0 %v65
  %v157 = vpop.f32.mrf.mxu0
  %v158 = vadd.f32 %v43, %v157
  %v159 = vpop.f32.mrf.mxu0
  %v160 = vadd.f32 %v47, %v159
  %161 = vmatprep.mubr.f32.mxu0 0.0
  %162 = vmatmul.mubr.f32.gmra.mxu0 %v68
  %v163 = vpop.f32.mrf.mxu0
  %v164 = vadd.f32 %v43, %v163
  %v165 = vpop.f32.mrf.mxu0
  %v166 = vadd.f32 %v47, %v165
  %167 = vmatprep.mubr.f32.mxu0 0.0
  %168 = vmatmul.mubr.f32.gmra.mxu0 %v71
  %v169 = vpop.f32.mrf.mxu0
  %v170 = vadd.f32 %v43, %v169
  %v171 = vpop.f32.mrf.mxu0
  %v172 = vadd.f32 %v47, %v171
  %173 = vmatprep.mubr.f32.mxu0 0.0
  %174 = vmatmul.mubr.f32.gmra.mxu0 %v74
  %v175 = vpop.f32.mrf.mxu0
  %v176 = vadd.f32 %v43, %v175
  %v177 = vpop.f32.mrf.mxu0
  %v178 = vadd.f32 %v47, %v177
  %179 = vmatprep.mubr.f32.mxu0 0.0
  %180 = vmatmul.mubr.f32.gmra.mxu0 %v77
  %v181 = vpop.f32.mrf.mxu0
  %v182 = vadd.f32 %v43, %v181
  %v183 = vpop.f32.mrf.mxu0
  %v184 = vadd.f32 %v47, %v183
  %185 = vmatprep.mubr.f32.mxu0 0.0
  %186 = vmatmul.mubr.f32.gmra.mxu0 %v80
  %v187 = vpop.f32.mrf.mxu0
  %v188 = vadd.f32 %v43, %v187
  %v189 = vpop.f32.mrf.mxu0
  %v190 = vadd.f32 %v47, %v189
  %191 = vmatprep.mubr.f32.mxu0 0.0
  %192 = vmatmul.mubr.f32.gmra.mxu0 %v83
  %v193 = vpop.f32.mrf.mxu0
  %v194 = vadd.f32 %v43, %v193
  %v195 = vpop.f32.mrf.mxu0
  %v196 = vadd.f32 %v47, %v195
  %197 = vdwg.mxu0
  %198 = vmatprep.subr.mxu0 0.0
  %199 = vmatpush1.msra.mxu0 0.0
  %200 = vmatprep.subr.mxu0 0.0
  %201 = vmatpush1.msra.mxu0 0.0
  %202 = vmatprep.subr.mxu0 0.0
  %203 = vmatpush1.msra.mxu0 0.0
  %204 = vmatprep.subr.mxu0 0.0
  %205 = vmatpush1.msra.mxu0 0.0
  %206 = vmatprep.subr.mxu0 0.0
  %207 = vmatpush1.msra.mxu0 0.0
  %208 = vmatprep.subr.mxu0 0.0
  %209 = vmatpush1.msra.mxu0 0.0
  %210 = vmatprep.subr.mxu0 0.0
  %211 = vmatpush1.msra.mxu0 0.0
  %212 = vmatprep.subr.mxu0 0.0
  %213 = vmatpush1.msra.mxu0 0.0
  %214 = vmatprep.subr.mxu0 0.0
  %215 = vmatpush1.msra.mxu0 0.0
  %216 = vmatprep.subr.mxu0 0.0
  %217 = vmatpush1.msra.mxu0 0.0
  %218 = vmatprep.subr.mxu0 0.0
  %219 = vmatpush1.msra.mxu0 0.0
  %220 = vmatprep.subr.mxu0 0.0
  %221 = vmatpush1.msra.mxu0 0.0
  %222 = vmatprep.subr.mxu0 %v37
  %223 = vmatpush1.msra.mxu0 %v36
  %224 = vmatprep.subr.mxu0 %v33
  %225 = vmatpush1.msra.mxu0 %v32
  %226 = vmatprep.subr.mxu0 %v29
  %227 = vmatpush1.msra.mxu0 %v28
  %228 = vmatprep.subr.mxu0 %v25
  %229 = vmatpush1.msra.mxu0 %v24
  %230 = vmatprep.subr.mxu0 0.0
  %231 = vmatpush2.msra.mxu0 0.0
  %232 = vmatprep.subr.mxu0 0.0
  %233 = vmatpush2.msra.mxu0 0.0
  %234 = vmatprep.subr.mxu0 0.0
  %235 = vmatpush2.msra.mxu0 0.0
  %236 = vmatprep.subr.mxu0 0.0
  %237 = vmatpush2.msra.mxu0 0.0
  %238 = vmatprep.subr.mxu0 0.0
  %239 = vmatpush2.msra.mxu0 0.0
  %240 = vmatprep.subr.mxu0 0.0
  %241 = vmatpush2.msra.mxu0 0.0
  %242 = vmatprep.subr.mxu0 0.0
  %243 = vmatpush2.msra.mxu0 0.0
  %244 = vmatprep.subr.mxu0 0.0
  %245 = vmatpush2.msra.mxu0 0.0
  %246 = vmatprep.subr.mxu0 0.0
  %247 = vmatpush2.msra.mxu0 0.0
  %248 = vmatprep.subr.mxu0 0.0
  %249 = vmatpush2.msra.mxu0 0.0
  %250 = vmatprep.subr.mxu0 0.0
  %251 = vmatpush2.msra.mxu0 0.0
  %252 = vmatprep.subr.mxu0 0.0
  %253 = vmatpush2.msra.mxu0 0.0
  %254 = vmatprep.subr.mxu0 0.0
  %255 = vmatpush2.msra.mxu0 0.0
  %256 = vmatprep.subr.mxu0 0.0
  %257 = vmatpush2.msra.mxu0 0.0
  %258 = vmatprep.subr.mxu0 0.0
  %259 = vmatpush2.msra.mxu0 0.0
  %260 = vmatprep.subr.mxu0 0.0
  %261 = vmatpush2.msra.mxu0 0.0
  %262 = vmatprep.mubr.f32.mxu0 0.0
  %263 = vmatmul.mubr.f32.gmra.mxu0 %v62
  %v264 = vpop.f32.mrf.mxu0
  %v265 = vadd.f32 %v51, %v264
  %v266 = vpop.f32.mrf.mxu0
  %v267 = vadd.f32 %v55, %v266
  %268 = vmatprep.mubr.f32.mxu0 0.0
  %269 = vmatmul.mubr.f32.gmra.mxu0 %v65
  %v270 = vpop.f32.mrf.mxu0
  %v271 = vadd.f32 %v51, %v270
  %v272 = vpop.f32.mrf.mxu0
  %v273 = vadd.f32 %v55, %v272
  %274 = vmatprep.mubr.f32.mxu0 0.0
  %275 = vmatmul.mubr.f32.gmra.mxu0 %v68
  %v276 = vpop.f32.mrf.mxu0
  %v277 = vadd.f32 %v51, %v276
  %v278 = vpop.f32.mrf.mxu0
  %v279 = vadd.f32 %v55, %v278
  %280 = vmatprep.mubr.f32.mxu0 0.0
  %281 = vmatmul.mubr.f32.gmra.mxu0 %v71
  %v282 = vpop.f32.mrf.mxu0
  %v283 = vadd.f32 %v51, %v282
  %v284 = vpop.f32.mrf.mxu0
  %v285 = vadd.f32 %v55, %v284
  %286 = vmatprep.mubr.f32.mxu0 0.0
  %287 = vmatmul.mubr.f32.gmra.mxu0 %v74
  %v288 = vpop.f32.mrf.mxu0
  %v289 = vadd.f32 %v51, %v288
  %v290 = vpop.f32.mrf.mxu0
  %v291 = vadd.f32 %v55, %v290
  %292 = vmatprep.mubr.f32.mxu0 0.0
  %293 = vmatmul.mubr.f32.gmra.mxu0 %v77
  %v294 = vpop.f32.mrf.mxu0
  %v295 = vadd.f32 %v51, %v294
  %v296 = vpop.f32.mrf.mxu0
  %v297 = vadd.f32 %v55, %v296
  %298 = vmatprep.mubr.f32.mxu0 0.0
  %299 = vmatmul.mubr.f32.gmra.mxu0 %v80
  %v300 = vpop.f32.mrf.mxu0
  %v301 = vadd.f32 %v51, %v300
  %v302 = vpop.f32.mrf.mxu0
  %v303 = vadd.f32 %v55, %v302
  %304 = vmatprep.mubr.f32.mxu0 0.0
  %305 = vmatmul.mubr.f32.gmra.mxu0 %v83
  %v306 = vpop.f32.mrf.mxu0
  %v307 = vadd.f32 %v51, %v306
  %v308 = vpop.f32.mrf.mxu0
  %v309 = vadd.f32 %v55, %v308
  %310 = vdwg.mxu0
  %311 = vst [vmem:[%s3] sm:$0xff] %v152
  %312 = vst [vmem:[%s3 + $0x8] sm:$0xff] %v154
  %313 = vst [vmem:[%s3 + $0x10] sm:$0xff] %v265
  %314 = vst [vmem:[%s3 + $0x18] sm:$0xff] %v267
  %315 = vst [vmem:[%s3 + $0x20] sm:$0xff] %v158
  %316 = vst [vmem:[%s3 + $0x28] sm:$0xff] %v160
  %317 = vst [vmem:[%s3 + $0x30] sm:$0xff] %v271
  %318 = vst [vmem:[%s3 + $0x38] sm:$0xff] %v273
  %319 = vst [vmem:[%s3 + $0x40] sm:$0xff] %v164
  %320 = vst [vmem:[%s3 + $0x48] sm:$0xff] %v166
  %321 = vst [vmem:[%s3 + $0x50] sm:$0xff] %v277
  %322 = vst [vmem:[%s3 + $0x58] sm:$0xff] %v279
  %323 = vst [vmem:[%s3 + $0x60] sm:$0xff] %v170
  %324 = vst [vmem:[%s3 + $0x68] sm:$0xff] %v172
  %325 = vst [vmem:[%s3 + $0x70] sm:$0xff] %v283
  %326 = vst [vmem:[%s3 + $0x78] sm:$0xff] %v285
  %327 = vst [vmem:[%s3 + $0x80] sm:$0xff] %v176
  %328 = vst [vmem:[%s3 + $0x88] sm:$0xff] %v178
  %329 = vst [vmem:[%s3 + $0x90] sm:$0xff] %v289
  %330 = vst [vmem:[%s3 + $0x98] sm:$0xff] %v291
  %331 = vst [vmem:[%s3 + $0xa0] sm:$0xff] %v182
  %332 = vst [vmem:[%s3 + $0xa8] sm:$0xff] %v184
  %333 = vst [vmem:[%s3 + $0xb0] sm:$0xff] %v295
  %334 = vst [vmem:[%s3 + $0xb8] sm:$0xff] %v297
  %335 = vst [vmem:[%s3 + $0xc0] sm:$0xff] %v188
  %336 = vst [vmem:[%s3 + $0xc8] sm:$0xff] %v190
  %337 = vst [vmem:[%s3 + $0xd0] sm:$0xff] %v301
  %338 = vst [vmem:[%s3 + $0xd8] sm:$0xff] %v303
  %339 = vst [vmem:[%s3 + $0xe0] sm:$0xff] %v194
  %340 = vst [vmem:[%s3 + $0xe8] sm:$0xff] %v196
  %341 = vst [vmem:[%s3 + $0xf0] sm:$0xff] %v307
  %342 = vst [vmem:[%s3 + $0xf8] sm:$0xff] %v309
  // Predicated region
  $region14: #{decoder_rnn_forward.3} parent=0 // pred_check
    _
  $region15: #{decoder_rnn_forward.3} parent=0 // pred_check_branch
    %344 = sbr.rel (0) target = $region17
  $region16: #{decoder_rnn_forward.3} parent=0 // pred_region
    _
  $region17: #{decoder_rnn_forward.3} parent=0 // pred_fallthru
    _
  // Predicated region
  $region18: #{decoder_rnn_forward.3} parent=0 // pred_check
    _
  $region19: #{decoder_rnn_forward.3} parent=0 // pred_check_branch
    %346 = sbr.rel (0) target = $region21
  $region20: #{decoder_rnn_forward.3} parent=0 // pred_region
    _
  $region21: #{decoder_rnn_forward.3} parent=0 // pred_fallthru
    _

// kernel: decoder_rnn_forward.4
$region0: #{decoder_rnn_forward.4}
  #allocation0 [shape = 'u32[]', space=smem, size = 0x4, offset = 0x4, fixed_abs, tag = 'smem constant byte address 0x4 - core index']
  #allocation1 [shape = 'u32[144,128]{1,0:T(1,128)}', space=vmem, size = 0x12000, scoped, tag = 'internal scratch']
  #allocation2 [shape = 'f32[8,128]{1,0:T(8,128)}', space=vmem, size = 0x1000, scoped, tag = 'scratch operand']
  #allocation3 [shape = 'f32[8,128]{1,0:T(8,128)}', space=vmem, size = 0x1000, scoped, tag = 'scratch operand']
  %s0 = inlined_call_operand.vmem [shape: f32[8,8,512], index: 0, kind: input, shape index: {}]
  %s1 = inlined_call_operand.vmem [shape: f32[128,512], index: 1, kind: input, shape index: {}]
  %s2 = inlined_call_operand.vmem [shape: f32[8,8,128], index: 2, kind: output, shape index: {}]
  %s3 = sld [smem:[#allocation0]]
  $region45: #{decoder_rnn_forward.4} parent=0
    _
  %s5 = ssub.s32 1, %s3
  %s6 = scalar_select 0, %s5, %s3
  loop: start=0, step=1, limit=10
  $region2: #{decoder_rnn_forward.4} parent=0 // loop_pre_header
    _
  $region3: #{decoder_rnn_forward.4} parent=0 // loop_header
    %s8 = sphi 0, %s12
    %p9 = scmp.ge.s32.totalorder %s8, 10
    %s18 = sphi 0, %s20
    %s21 = sphi 0, %s18
    %s22 = sphi 0, %s21
    %s38 = sphi 0, %s22
    %s42 = sphi 0, %s42
    %s44 = sphi 0, %s42
    %s45 = sphi 0, %s44
    %s59 = sphi 0, %s45
    %s65 = sphi 0, %s67
    %s68 = sphi 0, %s65
    %s69 = sphi 0, %s68
    %s85 = sphi 0, %s69
  $region4: #{decoder_rnn_forward.4} parent=0 // loop_header_branch
    %11 = sbr.rel (%p9) target = $region8
  $region5: #{decoder_rnn_forward.4} parent=0 // loop_body
    %s13 = ssub.s32 %s8, 1
    %s14 = ssub.s32 %s8, 2
    %s15 = sadd.s32 %s8, 1
    %s16 = ssub.s32 %s8, %s15
    %p17 = scmp.eq.s32.totalorder %s16, 0
    %s19 = sadd.s32 %s18, 1
    %s20 = scalar_select %p17, %s18, %s19
    %p23 = pneg %p17
    %p24 = scmp.eq.s32.totalorder %s8, 7
    %p25 = por %p23, %p24
    %p26 = scmp.ne.s32.totalorder %s18, %s21
    %p27 = scmp.eq.s32.totalorder %s8, 0
    %p28 = por %p26, %p27
    %p29 = scmp.ne.s32.totalorder %s18, %s21
    %p30 = scmp.eq.s32.totalorder %s13, 7
    %p31 = por %p29, %p30
    %p32 = scmp.ne.s32.totalorder %s21, %s22
    %p33 = scmp.eq.s32.totalorder %s13, 0
    %p34 = por %p32, %p33
    %p35 = scmp.ne.s32.totalorder %s21, %s22
    %p36 = scmp.eq.s32.totalorder %s14, 7
    %p37 = por %p35, %p36
    %p39 = scmp.ne.s32.totalorder %s22, %s38
    %p40 = scmp.eq.s32.totalorder %s14, 0
    %p41 = por %p39, %p40
    %s43 = sadd.s32 %s42, 1
    %p46 = scmp.eq.s32.totalorder %s8, 7
    %p47 = scmp.ne.s32.totalorder %s42, %s44
    %p48 = scmp.eq.s32.totalorder %s8, 0
    %p49 = por %p47, %p48
    %p50 = scmp.ne.s32.totalorder %s42, %s44
    %p51 = scmp.eq.s32.totalorder %s13, 7
    %p52 = por %p50, %p51
    %p53 = scmp.ne.s32.totalorder %s44, %s45
    %p54 = scmp.eq.s32.totalorder %s13, 0
    %p55 = por %p53, %p54
    %p56 = scmp.ne.s32.totalorder %s44, %s45
    %p57 = scmp.eq.s32.totalorder %s14, 7
    %p58 = por %p56, %p57
    %p60 = scmp.ne.s32.totalorder %s45, %s59
    %p61 = scmp.eq.s32.totalorder %s14, 0
    %p62 = por %p60, %p61
    %s63 = ssub.s32 %s8, %s15
    %p64 = scmp.eq.s32.totalorder %s63, 0
    %s66 = sadd.s32 %s65, 1
    %s67 = scalar_select %p64, %s65, %s66
    %p70 = pneg %p64
    %p71 = scmp.eq.s32.totalorder %s8, 7
    %p72 = por %p70, %p71
    %p73 = scmp.ne.s32.totalorder %s65, %s68
    %p74 = scmp.eq.s32.totalorder %s8, 0
    %p75 = por %p73, %p74
    %p76 = scmp.ne.s32.totalorder %s65, %s68
    %p77 = scmp.eq.s32.totalorder %s13, 7
    %p78 = por %p76, %p77
    %p79 = scmp.ne.s32.totalorder %s68, %s69
    %p80 = scmp.eq.s32.totalorder %s13, 0
    %p81 = por %p79, %p80
    %p82 = scmp.ne.s32.totalorder %s68, %s69
    %p83 = scmp.eq.s32.totalorder %s14, 7
    %p84 = por %p82, %p83
    %p86 = scmp.ne.s32.totalorder %s69, %s85
    %p87 = scmp.eq.s32.totalorder %s14, 0
    %p88 = por %p86, %p87
    %p89 = scmp.le.s32.totalorder 1, %s8
    %p90 = scmp.lt.s32.totalorder %s8, 9
    %p91 = pnand %p89, %p90
    %p92 = pneg %p91
    // Predicated region
    $region9: #{decoder_rnn_forward.4} parent=5 // pred_check
      _
    $region10: #{decoder_rnn_forward.4} parent=5 // pred_check_branch
      %94 = sbr.rel (%p91) target = $region12
    $region11: #{decoder_rnn_forward.4} parent=5 // pred_region
      %s95 = ssub.s32 %s8, 1
      // Predicated region
      $region13: #{decoder_rnn_forward.4} parent=11 // pred_check
        %p96 = pneg %p55
      $region14: #{decoder_rnn_forward.4} parent=11 // pred_check_branch
        %98 = sbr.rel (%p96) target = $region16
      $region15: #{decoder_rnn_forward.4} parent=11 // pred_region
        _
      $region16: #{decoder_rnn_forward.4} parent=11 // pred_fallthru
        _
    $region12: #{decoder_rnn_forward.4} parent=5 // pred_fallthru
      _
    %p99 = scmp.lt.s32.totalorder %s8, 8
    // Predicated region
    $region17: #{decoder_rnn_forward.4} parent=5 // pred_check
      %p100 = pneg %p99
    $region18: #{decoder_rnn_forward.4} parent=5 // pred_check_branch
      %102 = sbr.rel (%p100) target = $region20
    $region19: #{decoder_rnn_forward.4} parent=5 // pred_region
      // Predicated region
      $region21: #{decoder_rnn_forward.4} parent=19 // pred_check
        %p103 = pneg %p28
      $region22: #{decoder_rnn_forward.4} parent=19 // pred_check_branch
        %105 = sbr.rel (%p103) target = $region24
      $region23: #{decoder_rnn_forward.4} parent=19 // pred_region
        %p106 = scmp.lt.s32.totalorder %s8, 7
        %s107 = scalar_select %p106, %s8, 7
        %s108 = smul.addr %s107, 4
        %s109 = smul.addr %s108, 8
        %s110 = scalar_lea.vmem %s0, %s109
      $region24: #{decoder_rnn_forward.4} parent=19 // pred_fallthru
        _
    $region20: #{decoder_rnn_forward.4} parent=5 // pred_fallthru
      _
    %p111 = scmp.le.s32.totalorder 1, %s8
    %p112 = scmp.lt.s32.totalorder %s8, 9
    %p113 = pnand %p111, %p112
    %p114 = pneg %p113
    // Predicated region
    $region25: #{decoder_rnn_forward.4} parent=5 // pred_check
      _
    $region26: #{decoder_rnn_forward.4} parent=5 // pred_check_branch
      %116 = sbr.rel (%p113) target = $region28
    $region27: #{decoder_rnn_forward.4} parent=5 // pred_region
      %s117 = ssub.s32 %s8, 1
      %p118 = scmp.lt.s32.totalorder %s13, 7
      %s119 = scalar_select %p118, %s13, 7
      %s120 = smul.addr %s119, 4
      %s121 = smul.addr %s120, 8
      %s122 = scalar_lea.vmem %s0, %s121
      %p123 = pneg %p34
      %p124 = pneg %p31
      %p125 = pneg %p55
      %p126 = pneg %p52
      %p127 = pneg %p81
      %p128 = pneg %p78
      %p129 = scmp.lt.s32.totalorder %s13, 7
      %s130 = scalar_select %p129, %s13, 7
      %s131 = smul.addr %s130, 8
      %s132 = scalar_lea.vmem %s2, %s131
      %p133 = scmp.lt.s32.totalorder %s13, 7
      %s134 = scalar_select %p133, %s13, 7
      %s135 = smul.addr %s134, 4
      %s136 = smul.addr %s135, 8
      %s137 = scalar_lea.vmem %s0, %s136
      %p138 = scmp.lt.s32.totalorder %s13, 7
      %s139 = scalar_select %p138, %s13, 7
      %s140 = smul.addr %s139, 8
      %s141 = scalar_lea.vmem %s2, %s140
      %p142 = scmp.eq.s32.totalorder %s13, 0
      // Predicated region
      $region29: #{decoder_rnn_forward.4} parent=27 // pred_check
        %p143 = pneg %p142
      $region30: #{decoder_rnn_forward.4} parent=27 // pred_check_branch
        %145 = sbr.rel (%p143) target = $region32
      $region31: #{decoder_rnn_forward.4} parent=27 // pred_region
        %146 = vst [vmem:[#allocation2] sm:$0xff] 0.0
        %147 = vst [vmem:[#allocation3] sm:$0xff] 0.0
      $region32: #{decoder_rnn_forward.4} parent=27 // pred_fallthru
        _
      %v148 = vld [vmem:[%s137] sm:$0xff]
      %v149 = vld [vmem:[%s137 + $0x8] sm:$0xff]
      %v150 = vld [vmem:[%s137 + $0x10] sm:$0xff]
      %v151 = vld [vmem:[%s137 + $0x18] sm:$0xff]
      %v152 = vld [vmem:[#allocation2] sm:$0xff]
      %v153 = vld [vmem:[%s1] sm:$0xff]
      %v154 = vld [vmem:[%s1 + $0x8] sm:$0xff]
      %v155 = vld [vmem:[%s1 + $0x10] sm:$0xff]
      %v156 = vld [vmem:[%s1 + $0x18] sm:$0xff]
      %v157 = vld [vmem:[%s1 + $0x20] sm:$0xff]
      %v158 = vld [vmem:[%s1 + $0x28] sm:$0xff]
      %v159 = vld [vmem:[%s1 + $0x30] sm:$0xff]
      %v160 = vld [vmem:[%s1 + $0x38] sm:$0xff]
      %v161 = vld [vmem:[%s1 + $0x40] sm:$0xff]
      %v162 = vld [vmem:[%s1 + $0x48] sm:$0xff]
      %v163 = vld [vmem:[%s1 + $0x50] sm:$0xff]
      %v164 = vld [vmem:[%s1 + $0x58] sm:$0xff]
      %v165 = vld [vmem:[%s1 + $0x60] sm:$0xff]
      %v166 = vld [vmem:[%s1 + $0x68] sm:$0xff]
      %v167 = vld [vmem:[%s1 + $0x70] sm:$0xff]
      %v168 = vld [vmem:[%s1 + $0x78] sm:$0xff]
      %v169 = vld [vmem:[%s1 + $0x80] sm:$0xff]
      %v170 = vld [vmem:[%s1 + $0x88] sm:$0xff]
      %v171 = vld [vmem:[%s1 + $0x90] sm:$0xff]
      %v172 = vld [vmem:[%s1 + $0x98] sm:$0xff]
      %v173 = vld [vmem:[%s1 + $0xa0] sm:$0xff]
      %v174 = vld [vmem:[%s1 + $0xa8] sm:$0xff]
      %v175 = vld [vmem:[%s1 + $0xb0] sm:$0xff]
      %v176 = vld [vmem:[%s1 + $0xb8] sm:$0xff]
      %v177 = vld [vmem:[%s1 + $0xc0] sm:$0xff]
      %v178 = vld [vmem:[%s1 + $0xc8] sm:$0xff]
      %v179 = vld [vmem:[%s1 + $0xd0] sm:$0xff]
      %v180 = vld [vmem:[%s1 + $0xd8] sm:$0xff]
      %v181 = vld [vmem:[%s1 + $0xe0] sm:$0xff]
      %v182 = vld [vmem:[%s1 + $0xe8] sm:$0xff]
      %v183 = vld [vmem:[%s1 + $0xf0] sm:$0xff]
      %v184 = vld [vmem:[%s1 + $0xf8] sm:$0xff]
      %v185 = vld [vmem:[%s1 + $0x100] sm:$0xff]
      %v186 = vld [vmem:[%s1 + $0x108] sm:$0xff]
      %v187 = vld [vmem:[%s1 + $0x110] sm:$0xff]
      %v188 = vld [vmem:[%s1 + $0x118] sm:$0xff]
      %v189 = vld [vmem:[%s1 + $0x120] sm:$0xff]
      %v190 = vld [vmem:[%s1 + $0x128] sm:$0xff]
      %v191 = vld [vmem:[%s1 + $0x130] sm:$0xff]
      %v192 = vld [vmem:[%s1 + $0x138] sm:$0xff]
      %v193 = vld [vmem:[%s1 + $0x140] sm:$0xff]
      %v194 = vld [vmem:[%s1 + $0x148] sm:$0xff]
      %v195 = vld [vmem:[%s1 + $0x150] sm:$0xff]
      %v196 = vld [vmem:[%s1 + $0x158] sm:$0xff]
      %v197 = vld [vmem:[%s1 + $0x160] sm:$0xff]
      %v198 = vld [vmem:[%s1 + $0x168] sm:$0xff]
      %v199 = vld [vmem:[%s1 + $0x170] sm:$0xff]
      %v200 = vld [vmem:[%s1 + $0x178] sm:$0xff]
      %v201 = vld [vmem:[%s1 + $0x180] sm:$0xff]
      %v202 = vld [vmem:[%s1 + $0x188] sm:$0xff]
      %v203 = vld [vmem:[%s1 + $0x190] sm:$0xff]
      %v204 = vld [vmem:[%s1 + $0x198] sm:$0xff]
      %v205 = vld [vmem:[%s1 + $0x1a0] sm:$0xff]
      %v206 = vld [vmem:[%s1 + $0x1a8] sm:$0xff]
      %v207 = vld [vmem:[%s1 + $0x1b0] sm:$0xff]
      %v208 = vld [vmem:[%s1 + $0x1b8] sm:$0xff]
      %v209 = vld [vmem:[%s1 + $0x1c0] sm:$0xff]
      %v210 = vld [vmem:[%s1 + $0x1c8] sm:$0xff]
      %v211 = vld [vmem:[%s1 + $0x1d0] sm:$0xff]
      %v212 = vld [vmem:[%s1 + $0x1d8] sm:$0xff]
      %v213 = vld [vmem:[%s1 + $0x1e0] sm:$0xff]
      %v214 = vld [vmem:[%s1 + $0x1e8] sm:$0xff]
      %v215 = vld [vmem:[%s1 + $0x1f0] sm:$0xff]
      %v216 = vld [vmem:[%s1 + $0x1f8] sm:$0xff]
      %217 = vmatprep.subr.mxu0 %v214
      %218 = vmatpush1.msra.mxu0 %v213
      %219 = vmatprep.subr.mxu0 %v210
      %220 = vmatpush1.msra.mxu0 %v209
      %221 = vmatprep.subr.mxu0 %v206
      %222 = vmatpush1.msra.mxu0 %v205
      %223 = vmatprep.subr.mxu0 %v202
      %224 = vmatpush1.msra.mxu0 %v201
      %225 = vmatprep.subr.mxu0 %v198
      %226 = vmatpush1.msra.mxu0 %v197
      %227 = vmatprep.subr.mxu0 %v194
      %228 = vmatpush1.msra.mxu0 %v193
      %229 = vmatprep.subr.mxu0 %v190
      %230 = vmatpush1.msra.mxu0 %v189
      %231 = vmatprep.subr.mxu0 %v186
      %232 = vmatpush1.msra.mxu0 %v185
      %233 = vmatprep.subr.mxu0 %v182
      %234 = vmatpush1.msra.mxu0 %v181
      %235 = vmatprep.subr.mxu0 %v178
      %236 = vmatpush1.msra.mxu0 %v177
      %237 = vmatprep.subr.mxu0 %v174
      %238 = vmatpush1.msra.mxu0 %v173
      %239 = vmatprep.subr.mxu0 %v170
      %240 = vmatpush1.msra.mxu0 %v169
      %241 = vmatprep.subr.mxu0 %v166
      %242 = vmatpush1.msra.mxu0 %v165
      %243 = vmatprep.subr.mxu0 %v162
      %244 = vmatpush1.msra.mxu0 %v161
      %245 = vmatprep.subr.mxu0 %v158
      %246 = vmatpush1.msra.mxu0 %v157
      %247 = vmatprep.subr.mxu0 %v154
      %248 = vmatpush1.msra.mxu0 %v153
      %249 = vmatprep.subr.mxu0 0.0
      %250 = vmatpush2.msra.mxu0 0.0
      %251 = vmatprep.subr.mxu0 0.0
      %252 = vmatpush2.msra.mxu0 0.0
      %253 = vmatprep.subr.mxu0 0.0
      %254 = vmatpush2.msra.mxu0 0.0
      %255 = vmatprep.subr.mxu0 0.0
      %256 = vmatpush2.msra.mxu0 0.0
      %257 = vmatprep.subr.mxu0 0.0
      %258 = vmatpush2.msra.mxu0 0.0
      %259 = vmatprep.subr.mxu0 0.0
      %260 = vmatpush2.msra.mxu0 0.0
      %261 = vmatprep.subr.mxu0 0.0
      %262 = vmatpush2.msra.mxu0 0.0
      %263 = vmatprep.subr.mxu0 0.0
      %264 = vmatpush2.msra.mxu0 0.0
      %265 = vmatprep.subr.mxu0 0.0
      %266 = vmatpush2.msra.mxu0 0.0
      %267 = vmatprep.subr.mxu0 0.0
      %268 = vmatpush2.msra.mxu0 0.0
      %269 = vmatprep.subr.mxu0 0.0
      %270 = vmatpush2.msra.mxu0 0.0
      %271 = vmatprep.subr.mxu0 0.0
      %272 = vmatpush2.msra.mxu0 0.0
      %273 = vmatprep.subr.mxu0 0.0
      %274 = vmatpush2.msra.mxu0 0.0
      %275 = vmatprep.subr.mxu0 0.0
      %276 = vmatpush2.msra.mxu0 0.0
      %277 = vmatprep.subr.mxu0 0.0
      %278 = vmatpush2.msra.mxu0 0.0
      %279 = vmatprep.subr.mxu0 0.0
      %280 = vmatpush2.msra.mxu0 0.0
      %281 = vmatprep.mubr.f32.mxu0 0.0
      %282 = vmatmul.mubr.f32.gmra.mxu0 %v152
      %v283 = vpop.f32.mrf.mxu0
      %v284 = vadd.f32 0.0, %v283
      %v285 = vpop.f32.mrf.mxu0
      %v286 = vadd.f32 0.0, %v285
      %287 = vdwg.mxu0
      %288 = vmatprep.subr.mxu0 %v216
      %289 = vmatpush1.msra.mxu0 %v215
      %290 = vmatprep.subr.mxu0 %v212
      %291 = vmatpush1.msra.mxu0 %v211
      %292 = vmatprep.subr.mxu0 %v208
      %293 = vmatpush1.msra.mxu0 %v207
      %294 = vmatprep.subr.mxu0 %v204
      %295 = vmatpush1.msra.mxu0 %v203
      %296 = vmatprep.subr.mxu0 %v200
      %297 = vmatpush1.msra.mxu0 %v199
      %298 = vmatprep.subr.mxu0 %v196
      %299 = vmatpush1.msra.mxu0 %v195
      %300 = vmatprep.subr.mxu0 %v192
      %301 = vmatpush1.msra.mxu0 %v191
      %302 = vmatprep.subr.mxu0 %v188
      %303 = vmatpush1.msra.mxu0 %v187
      %304 = vmatprep.subr.mxu0 %v184
      %305 = vmatpush1.msra.mxu0 %v183
      %306 = vmatprep.subr.mxu0 %v180
      %307 = vmatpush1.msra.mxu0 %v179
      %308 = vmatprep.subr.mxu0 %v176
      %309 = vmatpush1.msra.mxu0 %v175
      %310 = vmatprep.subr.mxu0 %v172
      %311 = vmatpush1.msra.mxu0 %v171
      %312 = vmatprep.subr.mxu0 %v168
      %313 = vmatpush1.msra.mxu0 %v167
      %314 = vmatprep.subr.mxu0 %v164
      %315 = vmatpush1.msra.mxu0 %v163
      %316 = vmatprep.subr.mxu0 %v160
      %317 = vmatpush1.msra.mxu0 %v159
      %318 = vmatprep.subr.mxu0 %v156
      %319 = vmatpush1.msra.mxu0 %v155
      %320 = vmatprep.subr.mxu0 0.0
      %321 = vmatpush2.msra.mxu0 0.0
      %322 = vmatprep.subr.mxu0 0.0
      %323 = vmatpush2.msra.mxu0 0.0
      %324 = vmatprep.subr.mxu0 0.0
      %325 = vmatpush2.msra.mxu0 0.0
      %326 = vmatprep.subr.mxu0 0.0
      %327 = vmatpush2.msra.mxu0 0.0
      %328 = vmatprep.subr.mxu0 0.0
      %329 = vmatpush2.msra.mxu0 0.0
      %330 = vmatprep.subr.mxu0 0.0
      %331 = vmatpush2.msra.mxu0 0.0
      %332 = vmatprep.subr.mxu0 0.0
      %333 = vmatpush2.msra.mxu0 0.0
      %334 = vmatprep.subr.mxu0 0.0
      %335 = vmatpush2.msra.mxu0 0.0
      %336 = vmatprep.subr.mxu0 0.0
      %337 = vmatpush2.msra.mxu0 0.0
      %338 = vmatprep.subr.mxu0 0.0
      %339 = vmatpush2.msra.mxu0 0.0
      %340 = vmatprep.subr.mxu0 0.0
      %341 = vmatpush2.msra.mxu0 0.0
      %342 = vmatprep.subr.mxu0 0.0
      %343 = vmatpush2.msra.mxu0 0.0
      %344 = vmatprep.subr.mxu0 0.0
      %345 = vmatpush2.msra.mxu0 0.0
      %346 = vmatprep.subr.mxu0 0.0
      %347 = vmatpush2.msra.mxu0 0.0
      %348 = vmatprep.subr.mxu0 0.0
      %349 = vmatpush2.msra.mxu0 0.0
      %350 = vmatprep.subr.mxu0 0.0
      %351 = vmatpush2.msra.mxu0 0.0
      %352 = vmatprep.mubr.f32.mxu0 0.0
      %353 = vmatmul.mubr.f32.gmra.mxu0 %v152
      %v354 = vpop.f32.mrf.mxu0
      %v355 = vadd.f32 0.0, %v354
      %v356 = vpop.f32.mrf.mxu0
      %v357 = vadd.f32 0.0, %v356
      %358 = vdwg.mxu0
      %v359 = vadd.f32 %v148, %v284
      %v360 = vadd.f32 %v149, %v286
      %v361 = vadd.f32 %v150, %v355
      %v362 = vadd.f32 %v151, %v357
      %v363 = vxor.u32 %v359, 2147483648
      %v364 = vmul.f32 %v363, 1.442695
      %v365 = vpow.pop %v364
      %v366 = vadd.f32 %v365, 1.0
      %v367 = vrcp.pop %v366
      %v368 = vmul.f32 1.0, %v367
      %v369 = vxor.u32 %v360, 2147483648
      %v370 = vmul.f32 %v369, 1.442695
      %v371 = vpow.pop %v370
      %v372 = vadd.f32 %v371, 1.0
      %v373 = vrcp.pop %v372
      %v374 = vmul.f32 1.0, %v373
      %v375 = vtanh.pop %v361
      %v376 = vxor.u32 %v362, 2147483648
      %v377 = vmul.f32 %v376, 1.442695
      %v378 = vpow.pop %v377
      %v379 = vadd.f32 %v378, 1.0
      %v380 = vrcp.pop %v379
      %v381 = vmul.f32 1.0, %v380
      %v382 = vld [vmem:[#allocation3] sm:$0xff]
      %v383 = vmul.f32 %v374, %v382
      %v384 = vmul.f32 %v368, %v375
      %v385 = vadd.f32 %v383, %v384
      %v386 = vtanh.pop %v385
      %v387 = vmul.f32 %v381, %v386
      %388 = vst [vmem:[#allocation3] sm:$0xff] %v385
      %389 = vst [vmem:[#allocation2] sm:$0xff] %v387
      %390 = vst [vmem:[%s141] sm:$0xff] %v387
      %p391 = scmp.lt.s32.totalorder %s13, 7
      %s392 = scalar_select %p391, %s13, 7
      %s393 = smul.addr %s392, 8
      %s394 = scalar_lea.vmem %s2, %s393
      // Predicated region
      $region33: #{decoder_rnn_forward.4} parent=27 // pred_check
        %p395 = pneg %p78
      $region34: #{decoder_rnn_forward.4} parent=27 // pred_check_branch
        %397 = sbr.rel (%p395) target = $region36
      $region35: #{decoder_rnn_forward.4} parent=27 // pred_region
        _
      $region36: #{decoder_rnn_forward.4} parent=27 // pred_fallthru
        _
    $region28: #{decoder_rnn_forward.4} parent=5 // pred_fallthru
      _
    %p398 = scmp.le.s32.totalorder 2, %s8
    // Predicated region
    $region37: #{decoder_rnn_forward.4} parent=5 // pred_check
      %p399 = pneg %p398
    $region38: #{decoder_rnn_forward.4} parent=5 // pred_check_branch
      %401 = sbr.rel (%p399) target = $region40
    $region39: #{decoder_rnn_forward.4} parent=5 // pred_region
      %s402 = ssub.s32 %s8, 2
      // Predicated region
      $region41: #{decoder_rnn_forward.4} parent=39 // pred_check
        %p403 = pneg %p84
      $region42: #{decoder_rnn_forward.4} parent=39 // pred_check_branch
        %405 = sbr.rel (%p403) target = $region44
      $region43: #{decoder_rnn_forward.4} parent=39 // pred_region
        %p406 = scmp.lt.s32.totalorder %s14, 7
        %s407 = scalar_select %p406, %s14, 7
        %s408 = smul.addr %s407, 8
        %s409 = scalar_lea.vmem %s2, %s408
      $region44: #{decoder_rnn_forward.4} parent=39 // pred_fallthru
        _
    $region40: #{decoder_rnn_forward.4} parent=5 // pred_fallthru
      _
  $region6: #{decoder_rnn_forward.4} parent=0 // loop_footer
    %s12 = sadd.s32 1, %s8
  $region7: #{decoder_rnn_forward.4} parent=0 // loop_footer_branch
    %7 = sbr.rel target = $region3
  $region8: #{decoder_rnn_forward.4} parent=0 // loop_exit
    _

</llo_original>
